<compile_context>
chip_gen: v6e
topology: v6e:2x2x1
jax: 0.10.0
libtpu: 0.0.40
codegen_flags: <defaults>
</compile_context>

<pallas_src>
import jax
import jax.numpy as jnp
from jax import lax
from jax.experimental import pallas as pl
from jax.experimental.pallas import tpu as pltpu

# ----------------------------- static config --------------------------------
IN_DIM = 3                 # rel_pos / vel feature dim
PACKED_ROWS = 8            # rel(3) + vel(3) + bias-one(1) + zero(1)
H1, H2, H3 = 32, 32, 64    # fully_connected layer_sizes (input=6 prepended)
LEAKY_SLOPE = 0.01
MAX_TILE = 8192            # lane (batch) tile upper bound; ~5 MiB double-buffered IO
MIN_STEPS_LARGE = 4        # >=2 grid steps per TensorCore on v7x; pipelining on all


def _round_up(x, m):
    return (x + m - 1) // m * m


def _cdiv(a, b):
    return (a + b - 1) // b


# ------------------------------- kernel -------------------------------------
def state_network_kernel(x_ref, w1_ref, w2_ref, w3_ref, b_ref, out_ref):
    # x: (8, TB) f32 -- rows 0-2 rel_pos^T, rows 3-5 vel^T, row 6 ones (bias fold),
    # row 7 zeros.  Batch lives in the LANE dimension -> sublane (cheap) reduces.
    x = x_ref[...]
    row = lax.broadcasted_iota(jnp.int32, x.shape, 0)
    is_rel = row < IN_DIM
    is_vel = (row >= IN_DIM) & (row < 2 * IN_DIM)

    # Per-column squared norms via masked sublane reduces (no cancellation hazard).
    xx = x * x
    rel_sq = jnp.sum(jnp.where(is_rel, xx, 0.0), axis=0, keepdims=True)  # (1, TB)
    vel_sq = jnp.sum(jnp.where(is_vel, xx, 0.0), axis=0, keepdims=True)  # (1, TB)

    # rel: "sigmoid_like" -> unit-normalize (eps=1e-12) then scale by tanh(|x|/2)
    rel_scale = jnp.tanh(0.5 * jnp.sqrt(rel_sq)) * lax.rsqrt(
        jnp.maximum(rel_sq, 1e-24))
    # vel: "unit_norm" (F.normalize eps=1e-6  ->  eps^2 on the squared norm)
    vel_scale = lax.rsqrt(jnp.maximum(vel_sq, 1e-12))
    # Row 6 (bias-fold ones) and row 7 (zeros) must pass through unscaled.
    scale = jnp.where(is_rel, rel_scale, jnp.where(is_vel, vel_scale, 1.0))
    x_n = x * scale                                        # (8, TB)

    # Packed biases for layers 2/3 (b1 is folded into w1t column 6).
    b = b_ref[...]
    b2 = b[0:H2, :]
    b3 = b[H2:H2 + H3, :]

    # concat(rel_n, vel_n, 1) @ [W1; b1] == W1t(32,8) @ x_n(8,TB)
    h = jnp.dot(w1_ref[...], x_n, preferred_element_type=jnp.float32)
    h = jnp.maximum(h, LEAKY_SLOPE * h)
    h = jnp.dot(w2_ref[...], h, preferred_element_type=jnp.float32) + b2
    h = jnp.maximum(h, LEAKY_SLOPE * h)
    h = jnp.dot(w3_ref[...], h, preferred_element_type=jnp.float32) + b3
    h = jnp.maximum(h, LEAKY_SLOPE * h)                    # (64, TB), lane-dense

    # In-kernel transpose (XLU, hidden under the output DMA) so the wrapper never
    # re-streams the dominant output through a separate XLA transpose.
    out_ref[...] = jnp.transpose(h).astype(out_ref.dtype)  # (TB, 64)


# ------------------------------- wrapper -------------------------------------
def state_network_forward(rel_pos, vel, robot_radius, params,
                          out_dtype=jnp.float32):
    """rel_pos, vel: (B, 3); robot_radius: (B, 1) (unused for these norm methods).

    params (natural y = x @ W + b layout):
      w1: (6, 32), b1: (32,), w2: (32, 32), b2: (32,), w3: (32, 64), b3: (64,)

    Set out_dtype=jnp.bfloat16 if the downstream encoder tolerates it (cuts the
    dominant output HBM stream in half); all in-kernel math stays f32.
    """
    del robot_radius  # only used for 'lin_sigm_robot_radius' normalization
    B = rel_pos.shape[0]

    # Grid first (>= MIN_STEPS_LARGE steps when the batch allows -> >=2 steps/TC on
    # v7x megacore and pipeline overlap everywhere), then a balanced, 128-aligned tb.
    b128 = _round_up(max(B, 1), 128)
    grid = _cdiv(b128, MAX_TILE)
    if b128 >= MIN_STEPS_LARGE * 128:
        grid = max(grid, MIN_STEPS_LARGE)
    tb = _round_up(_cdiv(b128, grid), 128)
    b_pad = tb * grid

    # Packed input, built with one fused concat/pad/transpose:
    # rows 0-2 rel_pos^T, 3-5 vel^T, 6 ones (bias fold), 7 zeros; (8, b_pad).
    feats = jnp.concatenate(
        [rel_pos.astype(jnp.float32), vel.astype(jnp.float32),
         jnp.ones((B, 1), jnp.float32), jnp.zeros((B, 1), jnp.float32)],
        axis=1)                                             # (B, 8)
    x = jnp.pad(feats, ((0, b_pad - B), (0, 0))).T          # (8, b_pad)

    # Transposed / zero-padded weights; b1 folded into column 6 of w1t.
    w1t = jnp.zeros((H1, PACKED_ROWS), jnp.float32)
    w1t = w1t.at[:, 0:2 * IN_DIM].set(params["w1"].astype(jnp.float32).T)
    w1t = w1t.at[:, 2 * IN_DIM].set(params["b1"].astype(jnp.float32))
    w2t = params["w2"].astype(jnp.float32).T
    w3t = params["w3"].astype(jnp.float32).T
    b_packed = jnp.concatenate(
        [params["b2"].reshape(-1), params["b3"].reshape(-1)]
    ).astype(jnp.float32).reshape(H2 + H3, 1)

    const_spec = lambda shape: pl.BlockSpec(shape, lambda i: (0, 0))

    out = pl.pallas_call(
        state_network_kernel,
        out_shape=jax.ShapeDtypeStruct((b_pad, H3), out_dtype),
        grid_spec=pltpu.PrefetchScalarGridSpec(
            num_scalar_prefetch=0,
            grid=(grid,),
            in_specs=[
                pl.BlockSpec((PACKED_ROWS, tb), lambda i: (0, i)),  # packed input
                const_spec((H1, PACKED_ROWS)),                      # [W1^T | b1] (32, 8)
                const_spec((H2, H1)),                               # W2^T (32, 32)
                const_spec((H3, H2)),                               # W3^T (64, 32)
                const_spec((H2 + H3, 1)),                           # packed b2|b3 (96, 1)
            ],
            out_specs=pl.BlockSpec((tb, H3), lambda i: (i, 0)),     # (TB, 64)
        ),
        compiler_params=pltpu.CompilerParams(
            dimension_semantics=("parallel",),
            vmem_limit_bytes=32 * 1024 * 1024),
    )(x, w1t, w2t, w3t, b_packed)

    # Only a row slice (padded rows carry harmless garbage); no transpose pass.
    return out[:B]


# --------------------------- pure-JAX reference -------------------------------
def state_network_ref(rel_pos, vel, robot_radius, params):
    del robot_radius
    rel_norm = jnp.linalg.norm(rel_pos, axis=-1, keepdims=True)
    scaling = 2.0 / (1.0 + jnp.exp(-rel_norm)) - 1.0
    rel_n = rel_pos / jnp.maximum(rel_norm, 1e-12) * scaling
    vel_norm = jnp.linalg.norm(vel, axis=-1, keepdims=True)
    vel_n = vel / jnp.maximum(vel_norm, 1e-6)
    h = jnp.concatenate([rel_n, vel_n], axis=-1) @ params["w1"] + params["b1"]
    h = jnp.where(h > 0, h, LEAKY_SLOPE * h)
    h = h @ params["w2"] + params["b2"]
    h = jnp.where(h > 0, h, LEAKY_SLOPE * h)
    h = h @ params["w3"] + params["b3"]
    h = jnp.where(h > 0, h, LEAKY_SLOPE * h)
    return h


# --------------------------------- main ---------------------------------------
if __name__ == "__main__":
    key = jax.random.PRNGKey(0)
    k_rel, k_vel, k_rad, k1, k2, k3, k4, k5, k6 = jax.random.split(key, 9)

    B = 16
    rel_pos = jax.random.normal(k_rel, (B, IN_DIM), jnp.float32) * 2.0
    vel = jax.random.normal(k_vel, (B, IN_DIM), jnp.float32)
    robot_radius = jax.random.uniform(k_rad, (B, 1), jnp.float32) * 0.5

    def init_w(k, shape):
        fan_in = shape[0]
        return jax.random.uniform(k, shape, jnp.float32,
                                  -1.0, 1.0) / jnp.sqrt(jnp.float32(fan_in))

    params = dict(
        w1=init_w(k1, (2 * IN_DIM, H1)),
        b1=init_w(k2, (H1,)),
        w2=init_w(k3, (H1, H2)),
        b2=init_w(k4, (H2,)),
        w3=init_w(k5, (H2, H3)),
        b3=init_w(k6, (H3,)),
    )

    ref = state_network_ref(rel_pos, vel, robot_radius, params)

    # f32 output (default, bit-for-bit module semantics up to matmul rounding).
    out = state_network_forward(rel_pos, vel, robot_radius, params)
    out = jax.block_until_ready(out)
    assert out.shape == (B, H3)
    assert jnp.allclose(out, ref, atol=2e-3, rtol=2e-3), "f32 mismatch vs reference"

    # bf16 output variant (halves the dominant output HBM stream).
    out_bf16 = state_network_forward(rel_pos, vel, robot_radius, params,
                                     out_dtype=jnp.bfloat16)
    out_bf16 = jax.block_until_ready(out_bf16)
    assert out_bf16.shape == (B, H3)
    assert jnp.allclose(out_bf16.astype(jnp.float32), ref,
                        atol=3e-2, rtol=3e-2), "bf16 mismatch vs reference"

    print("KERNEL_OK")
</pallas_src>

<mosaic_0001>
module attributes {stable_mosaic.version = 11 : i64} {
  func.func @state_network_kernel(%arg0: i32, %arg1: memref<8x128xf32, #tpu.memory_space<vmem>>, %arg2: memref<32x8xf32, #tpu.memory_space<vmem>>, %arg3: memref<32x32xf32, #tpu.memory_space<vmem>>, %arg4: memref<64x32xf32, #tpu.memory_space<vmem>>, %arg5: memref<96x1xf32, #tpu.memory_space<vmem>>, %arg6: memref<128x64xf32, #tpu.memory_space<vmem>>) attributes {dimension_semantics = [#tpu.dimension_semantics<parallel>], iteration_bounds = array<i64: 1>, scalar_prefetch = 0 : i64, scratch_operands = 0 : i64, tpu.core_type = #tpu.core_type<tc>, window_params = [{transform_indices = @transform_0, window_bounds = array<i64: 8, 128>}, {pipeline_mode = #tpu.pipeline_mode<synchronous>, transform_indices = @transform_1, window_bounds = array<i64: 32, 8>}, {pipeline_mode = #tpu.pipeline_mode<synchronous>, transform_indices = @transform_2, window_bounds = array<i64: 32, 32>}, {pipeline_mode = #tpu.pipeline_mode<synchronous>, transform_indices = @transform_3, window_bounds = array<i64: 64, 32>}, {pipeline_mode = #tpu.pipeline_mode<synchronous>, transform_indices = @transform_4, window_bounds = array<i64: 96, 1>}, {transform_indices = @transform_5, window_bounds = array<i64: 128, 64>}]} {
    %c0 = arith.constant 0 : index
    %c0_0 = arith.constant 0 : index
    %0 = vector.load %arg1[%c0, %c0_0] : memref<8x128xf32, #tpu.memory_space<vmem>>, vector<8x128xf32>
    %1 = tpu.iota {dimensions = array<i32: 0>} : vector<8x128xi32>
    %c3_i32 = arith.constant 3 : i32
    %2 = vector.broadcast %c3_i32 : i32 to vector<8x128xi32>
    %3 = arith.cmpi slt, %1, %2 : vector<8x128xi32>
    %c3_i32_1 = arith.constant 3 : i32
    %4 = vector.broadcast %c3_i32_1 : i32 to vector<8x128xi32>
    %5 = arith.cmpi sge, %1, %4 : vector<8x128xi32>
    %c6_i32 = arith.constant 6 : i32
    %6 = vector.broadcast %c6_i32 : i32 to vector<8x128xi32>
    %7 = arith.cmpi slt, %1, %6 : vector<8x128xi32>
    %8 = arith.andi %5, %7 : vector<8x128xi1>
    %9 = arith.mulf %0, %0 : vector<8x128xf32>
    %cst = arith.constant 0.000000e+00 : f32
    %10 = vector.broadcast %cst : f32 to vector<8x128xf32>
    %11 = arith.select %3, %9, %10 : vector<8x128xi1>, vector<8x128xf32>
    %cst_2 = arith.constant dense<0.000000e+00> : vector<128xf32>
    %12 = vector.multi_reduction <add>, %11, %cst_2 [0] : vector<8x128xf32> to vector<128xf32>
    %13 = vector.shape_cast %12 : vector<128xf32> to vector<1x128xf32>
    %cst_3 = arith.constant 0.000000e+00 : f32
    %14 = vector.broadcast %cst_3 : f32 to vector<8x128xf32>
    %15 = arith.select %8, %9, %14 : vector<8x128xi1>, vector<8x128xf32>
    %cst_4 = arith.constant dense<0.000000e+00> : vector<128xf32>
    %16 = vector.multi_reduction <add>, %15, %cst_4 [0] : vector<8x128xf32> to vector<128xf32>
    %17 = vector.shape_cast %16 : vector<128xf32> to vector<1x128xf32>
    %18 = math.sqrt %13 : vector<1x128xf32>
    %cst_5 = arith.constant 5.000000e-01 : f32
    %19 = vector.broadcast %cst_5 : f32 to vector<1x128xf32>
    %20 = arith.mulf %19, %18 : vector<1x128xf32>
    %21 = math.tanh %20 : vector<1x128xf32>
    %cst_6 = arith.constant 1.000000e-24 : f32
    %22 = vector.broadcast %cst_6 : f32 to vector<1x128xf32>
    %23 = arith.maximumf %13, %22 : vector<1x128xf32>
    %24 = math.rsqrt %23 : vector<1x128xf32>
    %25 = arith.mulf %21, %24 : vector<1x128xf32>
    %cst_7 = arith.constant 9.99999996E-13 : f32
    %26 = vector.broadcast %cst_7 : f32 to vector<1x128xf32>
    %27 = arith.maximumf %17, %26 : vector<1x128xf32>
    %28 = math.rsqrt %27 : vector<1x128xf32>
    %cst_8 = arith.constant 1.000000e+00 : f32
    %29 = vector.shape_cast %28 : vector<1x128xf32> to vector<1x128xf32>
    %30 = vector.broadcast %29 : vector<1x128xf32> to vector<8x128xf32>
    %31 = vector.broadcast %cst_8 : f32 to vector<8x128xf32>
    %32 = arith.select %8, %30, %31 : vector<8x128xi1>, vector<8x128xf32>
    %33 = vector.shape_cast %25 : vector<1x128xf32> to vector<1x128xf32>
    %34 = vector.broadcast %33 : vector<1x128xf32> to vector<8x128xf32>
    %35 = arith.select %3, %34, %32 : vector<8x128xi1>, vector<8x128xf32>
    %36 = arith.mulf %0, %35 : vector<8x128xf32>
    %c0_9 = arith.constant 0 : index
    %c0_10 = arith.constant 0 : index
    %37 = vector.load %arg5[%c0_9, %c0_10] : memref<96x1xf32, #tpu.memory_space<vmem>>, vector<96x1xf32>
    %38 = vector.extract_strided_slice %37 {offsets = [0, 0], sizes = [32, 1], strides = [1, 1]} : vector<96x1xf32> to vector<32x1xf32>
    %39 = vector.extract_strided_slice %37 {offsets = [32, 0], sizes = [64, 1], strides = [1, 1]} : vector<96x1xf32> to vector<64x1xf32>
    %c0_11 = arith.constant 0 : index
    %c0_12 = arith.constant 0 : index
    %40 = vector.load %arg2[%c0_11, %c0_12] : memref<32x8xf32, #tpu.memory_space<vmem>>, vector<32x8xf32>
    %cst_13 = arith.constant dense<0.000000e+00> : vector<32x128xf32>
    %41 = tpu.matmul %40, %36, %cst_13 {dimension_numbers = #tpu.dot_dimension_numbers<[1], [0], [0], [1], [0, 0, 1, 1], [], []>} : vector<32x8xf32>, vector<8x128xf32>, vector<32x128xf32> -> vector<32x128xf32>
    %cst_14 = arith.constant 0.00999999977 : f32
    %42 = vector.broadcast %cst_14 : f32 to vector<32x128xf32>
    %43 = arith.mulf %42, %41 : vector<32x128xf32>
    %44 = arith.maximumf %41, %43 : vector<32x128xf32>
    %c0_15 = arith.constant 0 : index
    %c0_16 = arith.constant 0 : index
    %45 = vector.load %arg3[%c0_15, %c0_16] : memref<32x32xf32, #tpu.memory_space<vmem>>, vector<32x32xf32>
    %cst_17 = arith.constant dense<0.000000e+00> : vector<32x128xf32>
    %46 = tpu.matmul %45, %44, %cst_17 {dimension_numbers = #tpu.dot_dimension_numbers<[1], [0], [0], [1], [0, 0, 1, 1], [], []>} : vector<32x32xf32>, vector<32x128xf32>, vector<32x128xf32> -> vector<32x128xf32>
    %47 = vector.broadcast %38 : vector<32x1xf32> to vector<32x128xf32>
    %48 = arith.addf %46, %47 : vector<32x128xf32>
    %cst_18 = arith.constant 0.00999999977 : f32
    %49 = vector.broadcast %cst_18 : f32 to vector<32x128xf32>
    %50 = arith.mulf %49, %48 : vector<32x128xf32>
    %51 = arith.maximumf %48, %50 : vector<32x128xf32>
    %c0_19 = arith.constant 0 : index
    %c0_20 = arith.constant 0 : index
    %52 = vector.load %arg4[%c0_19, %c0_20] : memref<64x32xf32, #tpu.memory_space<vmem>>, vector<64x32xf32>
    %cst_21 = arith.constant dense<0.000000e+00> : vector<64x128xf32>
    %53 = tpu.matmul %52, %51, %cst_21 {dimension_numbers = #tpu.dot_dimension_numbers<[1], [0], [0], [1], [0, 0, 1, 1], [], []>} : vector<64x32xf32>, vector<32x128xf32>, vector<64x128xf32> -> vector<64x128xf32>
    %54 = vector.broadcast %39 : vector<64x1xf32> to vector<64x128xf32>
    %55 = arith.addf %53, %54 : vector<64x128xf32>
    %cst_22 = arith.constant 0.00999999977 : f32
    %56 = vector.broadcast %cst_22 : f32 to vector<64x128xf32>
    %57 = arith.mulf %56, %55 : vector<64x128xf32>
    %58 = arith.maximumf %55, %57 : vector<64x128xf32>
    %59 = tpu.transpose %58, [1, 0] : vector<64x128xf32> -> vector<128x64xf32>
    %c0_23 = arith.constant 0 : index
    %c0_24 = arith.constant 0 : index
    %60 = vector.load %arg6[%c0_23, %c0_24] : memref<128x64xf32, #tpu.memory_space<vmem>>, vector<128x64xf32>
    tpu.vector_store %arg6[%c0_23, %c0_24], %59 {strides = array<i32>} : memref<128x64xf32, #tpu.memory_space<vmem>>, vector<128x64xf32>,
    return
  }
  func.func @transform_0(%arg0: i32) -> (i32, i32) {
    %c0_i32 = arith.constant 0 : i32
    %c0_i32_0 = arith.constant 0 : i32
    return %c0_i32, %arg0 : i32, i32
  }
  func.func @transform_1(%arg0: i32) -> (i32, i32) {
    %c0_i32 = arith.constant 0 : i32
    %c0_i32_0 = arith.constant 0 : i32
    %c0_i32_1 = arith.constant 0 : i32
    return %c0_i32, %c0_i32_0 : i32, i32
  }
  func.func @transform_2(%arg0: i32) -> (i32, i32) {
    %c0_i32 = arith.constant 0 : i32
    %c0_i32_0 = arith.constant 0 : i32
    %c0_i32_1 = arith.constant 0 : i32
    return %c0_i32, %c0_i32_0 : i32, i32
  }
  func.func @transform_3(%arg0: i32) -> (i32, i32) {
    %c0_i32 = arith.constant 0 : i32
    %c0_i32_0 = arith.constant 0 : i32
    %c0_i32_1 = arith.constant 0 : i32
    return %c0_i32, %c0_i32_0 : i32, i32
  }
  func.func @transform_4(%arg0: i32) -> (i32, i32) {
    %c0_i32 = arith.constant 0 : i32
    %c0_i32_0 = arith.constant 0 : i32
    %c0_i32_1 = arith.constant 0 : i32
    return %c0_i32, %c0_i32_0 : i32, i32
  }
  func.func @transform_5(%arg0: i32) -> (i32, i32) {
    %c0_i32 = arith.constant 0 : i32
    %c0_i32_0 = arith.constant 0 : i32
    return %arg0, %c0_i32 : i32, i32
  }
}

</mosaic_0001>

<llo_original>
// kernel: tpu_custom_call.1
$region0: #{tpu_custom_call.1}
  #allocation0 [shape = 'u32[]', space=smem, size = 0x4, offset = 0x4, fixed_abs, tag = 'smem constant byte address 0x4 - core index']
  #allocation1 [shape = 'u32[144,128]{1,0:T(1,128)}', space=vmem, size = 0x12000, scoped, tag = 'internal scratch']
  %s0 = inlined_call_operand.vmem [shape: f32[8,128], index: 0, kind: input, shape index: {}]
  %s1 = inlined_call_operand.vmem [shape: f32[32,8], index: 1, kind: input, shape index: {}]
  %s2 = inlined_call_operand.vmem [shape: f32[32,32], index: 2, kind: input, shape index: {}]
  %s3 = inlined_call_operand.vmem [shape: f32[64,32], index: 3, kind: input, shape index: {}]
  %s4 = inlined_call_operand.vmem [shape: f32[96,1], index: 4, kind: input, shape index: {}]
  %s5 = inlined_call_operand.vmem [shape: f32[128,64], index: 5, kind: output, shape index: {}]
  %s6 = sld [smem:[#allocation0]]
  $region30: #{tpu_custom_call.1} parent=0
    _
  %s8 = ssub.s32 1, %s6
  %s9 = scalar_select 0, %s8, %s6
  // Predicated region
  $region2: #{tpu_custom_call.1} parent=0 // pred_check
    _
  $region3: #{tpu_custom_call.1} parent=0 // pred_check_branch
    %11 = sbr.rel (0) target = $region5
  $region4: #{tpu_custom_call.1} parent=0 // pred_region
    _
  $region5: #{tpu_custom_call.1} parent=0 // pred_fallthru
    _
  // Predicated region
  $region6: #{tpu_custom_call.1} parent=0 // pred_check
    _
  $region7: #{tpu_custom_call.1} parent=0 // pred_check_branch
    %13 = sbr.rel (0) target = $region9
  $region8: #{tpu_custom_call.1} parent=0 // pred_region
    _
  $region9: #{tpu_custom_call.1} parent=0 // pred_fallthru
    _
  // Predicated region
  $region10: #{tpu_custom_call.1} parent=0 // pred_check
    _
  $region11: #{tpu_custom_call.1} parent=0 // pred_check_branch
    %15 = sbr.rel (0) target = $region13
  $region12: #{tpu_custom_call.1} parent=0 // pred_region
    _
  $region13: #{tpu_custom_call.1} parent=0 // pred_fallthru
    _
  // Predicated region
  $region14: #{tpu_custom_call.1} parent=0 // pred_check
    _
  $region15: #{tpu_custom_call.1} parent=0 // pred_check_branch
    %17 = sbr.rel (0) target = $region17
  $region16: #{tpu_custom_call.1} parent=0 // pred_region
    _
  $region17: #{tpu_custom_call.1} parent=0 // pred_fallthru
    _
  // Predicated region
  $region18: #{tpu_custom_call.1} parent=0 // pred_check
    _
  $region19: #{tpu_custom_call.1} parent=0 // pred_check_branch
    %19 = sbr.rel (0) target = $region21
  $region20: #{tpu_custom_call.1} parent=0 // pred_region
    _
  $region21: #{tpu_custom_call.1} parent=0 // pred_fallthru
    _
  %v20 = vld [vmem:[%s0] sm:$0xff]
  %v21 = vlaneseq
  %v22 = vshrl.u32 %v21, 7
  %vm23 = vcmp.lt.s32.totalorder %v22, 3
  %vm24 = vcmp.ge.s32.totalorder %v22, 3
  %vm25 = vcmp.lt.s32.totalorder %v22, 6
  %vm26 = vmand %vm24, %vm25
  %v27 = vmul.f32 %v20, %v20
  %v28 = vsel %vm23, %v27, 0.0
  %v29 = vrot.slane %v28, 4
  %v30 = vadd.f32 %v28, %v29
  %v31 = vrot.slane %v30, 2
  %v32 = vadd.f32 %v30, %v31
  %v33 = vrot.slane %v32, 1
  %v34 = vadd.f32 %v32, %v33
  %v35 = vsel %vm26, %v27, 0.0
  %v36 = vrot.slane %v35, 4
  %v37 = vadd.f32 %v35, %v36
  %v38 = vrot.slane %v37, 2
  %v39 = vadd.f32 %v37, %v38
  %v40 = vrot.slane %v39, 1
  %v41 = vadd.f32 %v39, %v40
  %v42 = vrsqrt.pop %v34
  %v43 = vmul.f32 %v34, %v42
  %vm44 = vcmp.eq.f32.partialorder %v34, inf
  %v45 = vsel %vm44, %v34, %v43
  %vm46 = vcmp.eq.f32.partialorder %v34, 0.0
  %v47 = vand.u32 %v34, 2147483648
  %v48 = vsel %vm46, %v47, %v45
  %v49 = vmul.f32 %v48, 0.5
  %v50 = vtanh.pop %v49
  %v51 = vmax.f32 %v34, 1e-24
  %v52 = vrsqrt.pop %v51
  %v53 = vmul.f32 %v50, %v52
  %v54 = vmax.f32 %v41, 1e-12
  %v55 = vrsqrt.pop %v54
  %v56 = vsel %vm26, %v55, 1.0
  %v57 = vsel %vm23, %v53, %v56
  %v58 = vmul.f32 %v20, %v57
  %v59 = vld [vmem:[%s4] sm:$0xff]
  %v60 = vld [vmem:[%s4 + $0x8] sm:$0xff]
  %v61 = vld [vmem:[%s4 + $0x10] sm:$0xff]
  %v62 = vld [vmem:[%s4 + $0x18] sm:$0xff]
  %v63 = vld [vmem:[%s4 + $0x20] sm:$0xff]
  %v64 = vld [vmem:[%s4 + $0x28] sm:$0xff]
  %v65 = vld [vmem:[%s4 + $0x30] sm:$0xff]
  %v66 = vld [vmem:[%s4 + $0x38] sm:$0xff]
  %v67 = vld [vmem:[%s4 + $0x40] sm:$0xff]
  %v68 = vld [vmem:[%s4 + $0x48] sm:$0xff]
  %v69 = vld [vmem:[%s4 + $0x50] sm:$0xff]
  %v70 = vld [vmem:[%s4 + $0x58] sm:$0xff]
  %v71 = vld [vmem:[%s1] sm:$0xff]
  %v72 = vld [vmem:[%s1 + $0x8] sm:$0xff]
  %v73 = vld [vmem:[%s1 + $0x10] sm:$0xff]
  %v74 = vld [vmem:[%s1 + $0x18] sm:$0xff]
  %vm75 = vcmask 64512
  %v77 = vsel %vm75, %v71, 0
  %v80 = vsel %vm75, %v72, 0
  %v83 = vsel %vm75, %v73, 0
  %v86 = vsel %vm75, %v74, 0
  %88 = vmatprep.subr.mxu0 0.0
  %89 = vmatpush1.msra.mxu0 0.0
  %90 = vmatprep.subr.mxu0 0.0
  %91 = vmatpush1.msra.mxu0 0.0
  %92 = vmatprep.subr.mxu0 0.0
  %93 = vmatpush1.msra.mxu0 0.0
  %94 = vmatprep.subr.mxu0 0.0
  %95 = vmatpush1.msra.mxu0 0.0
  %96 = vmatprep.subr.mxu0 0.0
  %97 = vmatpush1.msra.mxu0 0.0
  %98 = vmatprep.subr.mxu0 0.0
  %99 = vmatpush1.msra.mxu0 0.0
  %100 = vmatprep.subr.mxu0 0.0
  %101 = vmatpush1.msra.mxu0 0.0
  %102 = vmatprep.subr.mxu0 0.0
  %103 = vmatpush1.msra.mxu0 0.0
  %104 = vmatprep.subr.mxu0 0.0
  %105 = vmatpush1.msra.mxu0 0.0
  %106 = vmatprep.subr.mxu0 0.0
  %107 = vmatpush1.msra.mxu0 0.0
  %108 = vmatprep.subr.mxu0 0.0
  %109 = vmatpush1.msra.mxu0 0.0
  %110 = vmatprep.subr.mxu0 0.0
  %111 = vmatpush1.msra.mxu0 0.0
  %112 = vmatprep.subr.mxu0 0.0
  %113 = vmatpush1.msra.mxu0 0.0
  %114 = vmatprep.subr.mxu0 0.0
  %115 = vmatpush1.msra.mxu0 0.0
  %116 = vmatprep.subr.mxu0 0.0
  %117 = vmatpush1.msra.mxu0 0.0
  %118 = vmatprep.subr.mxu0 0.0
  %119 = vmatpush1.msra.mxu0 %v58
  %120 = vmatprep.subr.mxu0 0.0
  %121 = vmatpush2.msra.mxu0 0.0
  %122 = vmatprep.subr.mxu0 0.0
  %123 = vmatpush2.msra.mxu0 0.0
  %124 = vmatprep.subr.mxu0 0.0
  %125 = vmatpush2.msra.mxu0 0.0
  %126 = vmatprep.subr.mxu0 0.0
  %127 = vmatpush2.msra.mxu0 0.0
  %128 = vmatprep.subr.mxu0 0.0
  %129 = vmatpush2.msra.mxu0 0.0
  %130 = vmatprep.subr.mxu0 0.0
  %131 = vmatpush2.msra.mxu0 0.0
  %132 = vmatprep.subr.mxu0 0.0
  %133 = vmatpush2.msra.mxu0 0.0
  %134 = vmatprep.subr.mxu0 0.0
  %135 = vmatpush2.msra.mxu0 0.0
  %136 = vmatprep.subr.mxu0 0.0
  %137 = vmatpush2.msra.mxu0 0.0
  %138 = vmatprep.subr.mxu0 0.0
  %139 = vmatpush2.msra.mxu0 0.0
  %140 = vmatprep.subr.mxu0 0.0
  %141 = vmatpush2.msra.mxu0 0.0
  %142 = vmatprep.subr.mxu0 0.0
  %143 = vmatpush2.msra.mxu0 0.0
  %144 = vmatprep.subr.mxu0 0.0
  %145 = vmatpush2.msra.mxu0 0.0
  %146 = vmatprep.subr.mxu0 0.0
  %147 = vmatpush2.msra.mxu0 0.0
  %148 = vmatprep.subr.mxu0 0.0
  %149 = vmatpush2.msra.mxu0 0.0
  %150 = vmatprep.subr.mxu0 0.0
  %151 = vmatpush2.msra.mxu0 0.0
  %152 = vmatprep.mubr.f32.mxu0 0.0
  %153 = vmatmul.mubr.f32.gmra.mxu0 %v77
  %v154 = vpop.f32.mrf.mxu0
  %v155 = vadd.f32 0.0, %v154
  %v156 = vpop.f32.mrf.mxu0
  %157 = vmatprep.mubr.f32.mxu0 0.0
  %158 = vmatmul.mubr.f32.gmra.mxu0 %v80
  %v159 = vpop.f32.mrf.mxu0
  %v160 = vadd.f32 0.0, %v159
  %v161 = vpop.f32.mrf.mxu0
  %162 = vmatprep.mubr.f32.mxu0 0.0
  %163 = vmatmul.mubr.f32.gmra.mxu0 %v83
  %v164 = vpop.f32.mrf.mxu0
  %v165 = vadd.f32 0.0, %v164
  %v166 = vpop.f32.mrf.mxu0
  %167 = vmatprep.mubr.f32.mxu0 0.0
  %168 = vmatmul.mubr.f32.gmra.mxu0 %v86
  %v169 = vpop.f32.mrf.mxu0
  %v170 = vadd.f32 0.0, %v169
  %v171 = vpop.f32.mrf.mxu0
  %172 = vdwg.mxu0
  %v173 = vmul.f32 %v155, 0.01
  %v174 = vmul.f32 %v160, 0.01
  %v175 = vmul.f32 %v165, 0.01
  %v176 = vmul.f32 %v170, 0.01
  %v177 = vmax.f32 %v155, %v173
  %v178 = vmax.f32 %v160, %v174
  %v179 = vmax.f32 %v165, %v175
  %v180 = vmax.f32 %v170, %v176
  %v181 = vld [vmem:[%s2] sm:$0xff]
  %v182 = vld [vmem:[%s2 + $0x8] sm:$0xff]
  %v183 = vld [vmem:[%s2 + $0x10] sm:$0xff]
  %v184 = vld [vmem:[%s2 + $0x18] sm:$0xff]
  %186 = vset.pattern.permute.xlu0 0
  %187 = vperm.xlu0 %186, %v59
  %v188 = vpop.permute.xlu0 %187
  %191 = vset.pattern.permute.xlu0 0
  %192 = vperm.xlu0 %191, %v60
  %v193 = vpop.permute.xlu0 %192
  %196 = vset.pattern.permute.xlu0 0
  %197 = vperm.xlu0 %196, %v61
  %v198 = vpop.permute.xlu0 %197
  %201 = vset.pattern.permute.xlu0 0
  %202 = vperm.xlu0 %201, %v62
  %v203 = vpop.permute.xlu0 %202
  %vm205 = vcmask 261120
  %v207 = vsel %vm205, %v181, 0
  %v210 = vsel %vm205, %v182, 0
  %v213 = vsel %vm205, %v183, 0
  %v216 = vsel %vm205, %v184, 0
  %218 = vmatprep.subr.mxu0 0.0
  %219 = vmatpush1.msra.mxu0 0.0
  %220 = vmatprep.subr.mxu0 0.0
  %221 = vmatpush1.msra.mxu0 0.0
  %222 = vmatprep.subr.mxu0 0.0
  %223 = vmatpush1.msra.mxu0 0.0
  %224 = vmatprep.subr.mxu0 0.0
  %225 = vmatpush1.msra.mxu0 0.0
  %226 = vmatprep.subr.mxu0 0.0
  %227 = vmatpush1.msra.mxu0 0.0
  %228 = vmatprep.subr.mxu0 0.0
  %229 = vmatpush1.msra.mxu0 0.0
  %230 = vmatprep.subr.mxu0 0.0
  %231 = vmatpush1.msra.mxu0 0.0
  %232 = vmatprep.subr.mxu0 0.0
  %233 = vmatpush1.msra.mxu0 0.0
  %234 = vmatprep.subr.mxu0 0.0
  %235 = vmatpush1.msra.mxu0 0.0
  %236 = vmatprep.subr.mxu0 0.0
  %237 = vmatpush1.msra.mxu0 0.0
  %238 = vmatprep.subr.mxu0 0.0
  %239 = vmatpush1.msra.mxu0 0.0
  %240 = vmatprep.subr.mxu0 0.0
  %241 = vmatpush1.msra.mxu0 0.0
  %242 = vmatprep.subr.mxu0 0.0
  %243 = vmatpush1.msra.mxu0 %v180
  %244 = vmatprep.subr.mxu0 0.0
  %245 = vmatpush1.msra.mxu0 %v179
  %246 = vmatprep.subr.mxu0 0.0
  %247 = vmatpush1.msra.mxu0 %v178
  %248 = vmatprep.subr.mxu0 0.0
  %249 = vmatpush1.msra.mxu0 %v177
  %250 = vmatprep.subr.mxu0 0.0
  %251 = vmatpush2.msra.mxu0 0.0
  %252 = vmatprep.subr.mxu0 0.0
  %253 = vmatpush2.msra.mxu0 0.0
  %254 = vmatprep.subr.mxu0 0.0
  %255 = vmatpush2.msra.mxu0 0.0
  %256 = vmatprep.subr.mxu0 0.0
  %257 = vmatpush2.msra.mxu0 0.0
  %258 = vmatprep.subr.mxu0 0.0
  %259 = vmatpush2.msra.mxu0 0.0
  %260 = vmatprep.subr.mxu0 0.0
  %261 = vmatpush2.msra.mxu0 0.0
  %262 = vmatprep.subr.mxu0 0.0
  %263 = vmatpush2.msra.mxu0 0.0
  %264 = vmatprep.subr.mxu0 0.0
  %265 = vmatpush2.msra.mxu0 0.0
  %266 = vmatprep.subr.mxu0 0.0
  %267 = vmatpush2.msra.mxu0 0.0
  %268 = vmatprep.subr.mxu0 0.0
  %269 = vmatpush2.msra.mxu0 0.0
  %270 = vmatprep.subr.mxu0 0.0
  %271 = vmatpush2.msra.mxu0 0.0
  %272 = vmatprep.subr.mxu0 0.0
  %273 = vmatpush2.msra.mxu0 0.0
  %274 = vmatprep.subr.mxu0 0.0
  %275 = vmatpush2.msra.mxu0 0.0
  %276 = vmatprep.subr.mxu0 0.0
  %277 = vmatpush2.msra.mxu0 0.0
  %278 = vmatprep.subr.mxu0 0.0
  %279 = vmatpush2.msra.mxu0 0.0
  %280 = vmatprep.subr.mxu0 0.0
  %281 = vmatpush2.msra.mxu0 0.0
  %282 = vmatprep.mubr.f32.mxu0 0.0
  %283 = vmatmul.mubr.f32.gmra.mxu0 %v207
  %v284 = vpop.f32.mrf.mxu0
  %v285 = vadd.f32 %v188, %v284
  %v286 = vpop.f32.mrf.mxu0
  %287 = vmatprep.mubr.f32.mxu0 0.0
  %288 = vmatmul.mubr.f32.gmra.mxu0 %v210
  %v289 = vpop.f32.mrf.mxu0
  %v290 = vadd.f32 %v193, %v289
  %v291 = vpop.f32.mrf.mxu0
  %292 = vmatprep.mubr.f32.mxu0 0.0
  %293 = vmatmul.mubr.f32.gmra.mxu0 %v213
  %v294 = vpop.f32.mrf.mxu0
  %v295 = vadd.f32 %v198, %v294
  %v296 = vpop.f32.mrf.mxu0
  %297 = vmatprep.mubr.f32.mxu0 0.0
  %298 = vmatmul.mubr.f32.gmra.mxu0 %v216
  %v299 = vpop.f32.mrf.mxu0
  %v300 = vadd.f32 %v203, %v299
  %v301 = vpop.f32.mrf.mxu0
  %302 = vdwg.mxu0
  %v303 = vmul.f32 %v285, 0.01
  %v304 = vmul.f32 %v290, 0.01
  %v305 = vmul.f32 %v295, 0.01
  %v306 = vmul.f32 %v300, 0.01
  %v307 = vmax.f32 %v285, %v303
  %v308 = vmax.f32 %v290, %v304
  %v309 = vmax.f32 %v295, %v305
  %v310 = vmax.f32 %v300, %v306
  %v311 = vld [vmem:[%s3] sm:$0xff]
  %v312 = vld [vmem:[%s3 + $0x8] sm:$0xff]
  %v313 = vld [vmem:[%s3 + $0x10] sm:$0xff]
  %v314 = vld [vmem:[%s3 + $0x18] sm:$0xff]
  %v315 = vld [vmem:[%s3 + $0x20] sm:$0xff]
  %v316 = vld [vmem:[%s3 + $0x28] sm:$0xff]
  %v317 = vld [vmem:[%s3 + $0x30] sm:$0xff]
  %v318 = vld [vmem:[%s3 + $0x38] sm:$0xff]
  %320 = vset.pattern.permute.xlu0 0
  %321 = vperm.xlu0 %320, %v63
  %v322 = vpop.permute.xlu0 %321
  %325 = vset.pattern.permute.xlu0 0
  %326 = vperm.xlu0 %325, %v64
  %v327 = vpop.permute.xlu0 %326
  %330 = vset.pattern.permute.xlu0 0
  %331 = vperm.xlu0 %330, %v65
  %v332 = vpop.permute.xlu0 %331
  %335 = vset.pattern.permute.xlu0 0
  %336 = vperm.xlu0 %335, %v66
  %v337 = vpop.permute.xlu0 %336
  %340 = vset.pattern.permute.xlu0 0
  %341 = vperm.xlu0 %340, %v67
  %v342 = vpop.permute.xlu0 %341
  %345 = vset.pattern.permute.xlu0 0
  %346 = vperm.xlu0 %345, %v68
  %v347 = vpop.permute.xlu0 %346
  %350 = vset.pattern.permute.xlu0 0
  %351 = vperm.xlu0 %350, %v69
  %v352 = vpop.permute.xlu0 %351
  %355 = vset.pattern.permute.xlu0 0
  %356 = vperm.xlu0 %355, %v70
  %v357 = vpop.permute.xlu0 %356
  %v360 = vsel %vm205, %v311, 0
  %v363 = vsel %vm205, %v312, 0
  %v366 = vsel %vm205, %v313, 0
  %v369 = vsel %vm205, %v314, 0
  %v372 = vsel %vm205, %v315, 0
  %v375 = vsel %vm205, %v316, 0
  %v378 = vsel %vm205, %v317, 0
  %v381 = vsel %vm205, %v318, 0
  %383 = vmatprep.subr.mxu0 0.0
  %384 = vmatpush1.msra.mxu0 0.0
  %385 = vmatprep.subr.mxu0 0.0
  %386 = vmatpush1.msra.mxu0 0.0
  %387 = vmatprep.subr.mxu0 0.0
  %388 = vmatpush1.msra.mxu0 0.0
  %389 = vmatprep.subr.mxu0 0.0
  %390 = vmatpush1.msra.mxu0 0.0
  %391 = vmatprep.subr.mxu0 0.0
  %392 = vmatpush1.msra.mxu0 0.0
  %393 = vmatprep.subr.mxu0 0.0
  %394 = vmatpush1.msra.mxu0 0.0
  %395 = vmatprep.subr.mxu0 0.0
  %396 = vmatpush1.msra.mxu0 0.0
  %397 = vmatprep.subr.mxu0 0.0
  %398 = vmatpush1.msra.mxu0 0.0
  %399 = vmatprep.subr.mxu0 0.0
  %400 = vmatpush1.msra.mxu0 0.0
  %401 = vmatprep.subr.mxu0 0.0
  %402 = vmatpush1.msra.mxu0 0.0
  %403 = vmatprep.subr.mxu0 0.0
  %404 = vmatpush1.msra.mxu0 0.0
  %405 = vmatprep.subr.mxu0 0.0
  %406 = vmatpush1.msra.mxu0 0.0
  %407 = vmatprep.subr.mxu0 0.0
  %408 = vmatpush1.msra.mxu0 %v310
  %409 = vmatprep.subr.mxu0 0.0
  %410 = vmatpush1.msra.mxu0 %v309
  %411 = vmatprep.subr.mxu0 0.0
  %412 = vmatpush1.msra.mxu0 %v308
  %413 = vmatprep.subr.mxu0 0.0
  %414 = vmatpush1.msra.mxu0 %v307
  %415 = vmatprep.subr.mxu0 0.0
  %416 = vmatpush2.msra.mxu0 0.0
  %417 = vmatprep.subr.mxu0 0.0
  %418 = vmatpush2.msra.mxu0 0.0
  %419 = vmatprep.subr.mxu0 0.0
  %420 = vmatpush2.msra.mxu0 0.0
  %421 = vmatprep.subr.mxu0 0.0
  %422 = vmatpush2.msra.mxu0 0.0
  %423 = vmatprep.subr.mxu0 0.0
  %424 = vmatpush2.msra.mxu0 0.0
  %425 = vmatprep.subr.mxu0 0.0
  %426 = vmatpush2.msra.mxu0 0.0
  %427 = vmatprep.subr.mxu0 0.0
  %428 = vmatpush2.msra.mxu0 0.0
  %429 = vmatprep.subr.mxu0 0.0
  %430 = vmatpush2.msra.mxu0 0.0
  %431 = vmatprep.subr.mxu0 0.0
  %432 = vmatpush2.msra.mxu0 0.0
  %433 = vmatprep.subr.mxu0 0.0
  %434 = vmatpush2.msra.mxu0 0.0
  %435 = vmatprep.subr.mxu0 0.0
  %436 = vmatpush2.msra.mxu0 0.0
  %437 = vmatprep.subr.mxu0 0.0
  %438 = vmatpush2.msra.mxu0 0.0
  %439 = vmatprep.subr.mxu0 0.0
  %440 = vmatpush2.msra.mxu0 0.0
  %441 = vmatprep.subr.mxu0 0.0
  %442 = vmatpush2.msra.mxu0 0.0
  %443 = vmatprep.subr.mxu0 0.0
  %444 = vmatpush2.msra.mxu0 0.0
  %445 = vmatprep.subr.mxu0 0.0
  %446 = vmatpush2.msra.mxu0 0.0
  %447 = vmatprep.mubr.f32.mxu0 0.0
  %448 = vmatmul.mubr.f32.gmra.mxu0 %v360
  %v449 = vpop.f32.mrf.mxu0
  %v450 = vadd.f32 %v322, %v449
  %v451 = vpop.f32.mrf.mxu0
  %452 = vmatprep.mubr.f32.mxu0 0.0
  %453 = vmatmul.mubr.f32.gmra.mxu0 %v363
  %v454 = vpop.f32.mrf.mxu0
  %v455 = vadd.f32 %v327, %v454
  %v456 = vpop.f32.mrf.mxu0
  %457 = vmatprep.mubr.f32.mxu0 0.0
  %458 = vmatmul.mubr.f32.gmra.mxu0 %v366
  %v459 = vpop.f32.mrf.mxu0
  %v460 = vadd.f32 %v332, %v459
  %v461 = vpop.f32.mrf.mxu0
  %462 = vmatprep.mubr.f32.mxu0 0.0
  %463 = vmatmul.mubr.f32.gmra.mxu0 %v369
  %v464 = vpop.f32.mrf.mxu0
  %v465 = vadd.f32 %v337, %v464
  %v466 = vpop.f32.mrf.mxu0
  %467 = vmatprep.mubr.f32.mxu0 0.0
  %468 = vmatmul.mubr.f32.gmra.mxu0 %v372
  %v469 = vpop.f32.mrf.mxu0
  %v470 = vadd.f32 %v342, %v469
  %v471 = vpop.f32.mrf.mxu0
  %472 = vmatprep.mubr.f32.mxu0 0.0
  %473 = vmatmul.mubr.f32.gmra.mxu0 %v375
  %v474 = vpop.f32.mrf.mxu0
  %v475 = vadd.f32 %v347, %v474
  %v476 = vpop.f32.mrf.mxu0
  %477 = vmatprep.mubr.f32.mxu0 0.0
  %478 = vmatmul.mubr.f32.gmra.mxu0 %v378
  %v479 = vpop.f32.mrf.mxu0
  %v480 = vadd.f32 %v352, %v479
  %v481 = vpop.f32.mrf.mxu0
  %482 = vmatprep.mubr.f32.mxu0 0.0
  %483 = vmatmul.mubr.f32.gmra.mxu0 %v381
  %v484 = vpop.f32.mrf.mxu0
  %v485 = vadd.f32 %v357, %v484
  %v486 = vpop.f32.mrf.mxu0
  %487 = vdwg.mxu0
  %v488 = vmul.f32 %v450, 0.01
  %v489 = vmul.f32 %v455, 0.01
  %v490 = vmul.f32 %v460, 0.01
  %v491 = vmul.f32 %v465, 0.01
  %v492 = vmul.f32 %v470, 0.01
  %v493 = vmul.f32 %v475, 0.01
  %v494 = vmul.f32 %v480, 0.01
  %v495 = vmul.f32 %v485, 0.01
  %v496 = vmax.f32 %v450, %v488
  %v497 = vmax.f32 %v455, %v489
  %v498 = vmax.f32 %v460, %v490
  %v499 = vmax.f32 %v465, %v491
  %v500 = vmax.f32 %v470, %v492
  %v501 = vmax.f32 %v475, %v493
  %v502 = vmax.f32 %v480, %v494
  %v503 = vmax.f32 %v485, %v495
  %504 = vxpose.xlu0.b32.start [1/16] %v496, 128
  %505 = vxpose.xlu0.b32.cont [2/16] %v497, 128
  %506 = vxpose.xlu0.b32.cont [3/16] %v498, 128
  %507 = vxpose.xlu0.b32.cont [4/16] %v499, 128
  %508 = vxpose.xlu0.b32.cont [5/16] %v500, 128
  %509 = vxpose.xlu0.b32.cont [6/16] %v501, 128
  %510 = vxpose.xlu0.b32.cont [7/16] %v502, 128
  %511 = vxpose.xlu0.b32.cont [8/16] %v503, 128
  %512 = vxpose.xlu0.b32.cont [9/16] 0.0, 128
  %513 = vxpose.xlu0.b32.cont [10/16] 0.0, 128
  %514 = vxpose.xlu0.b32.cont [11/16] 0.0, 128
  %515 = vxpose.xlu0.b32.cont [12/16] 0.0, 128
  %516 = vxpose.xlu0.b32.cont [13/16] 0.0, 128
  %517 = vxpose.xlu0.b32.cont [14/16] 0.0, 128
  %518 = vxpose.xlu0.b32.cont [15/16] 0.0, 128
  %519 = vxpose.xlu0.b32.end [16/16] 0.0, 128
  %v520 = vpop.trf.xlu0
  %v521 = vpop.trf.xlu0
  %v522 = vpop.trf.xlu0
  %v523 = vpop.trf.xlu0
  %v524 = vpop.trf.xlu0
  %v525 = vpop.trf.xlu0
  %v526 = vpop.trf.xlu0
  %v527 = vpop.trf.xlu0
  %v528 = vpop.trf.xlu0
  %v529 = vpop.trf.xlu0
  %v530 = vpop.trf.xlu0
  %v531 = vpop.trf.xlu0
  %v532 = vpop.trf.xlu0
  %v533 = vpop.trf.xlu0
  %v534 = vpop.trf.xlu0
  %v535 = vpop.trf.xlu0
  %vm536 = vcmask 523264
  %537 = vst.msk [vmem:[%s5] sm:$0xff] %vm536, %v520
  %538 = vst.msk [vmem:[%s5 + $0x8] sm:$0xff] %vm536, %v521
  %539 = vst.msk [vmem:[%s5 + $0x10] sm:$0xff] %vm536, %v522
  %540 = vst.msk [vmem:[%s5 + $0x18] sm:$0xff] %vm536, %v523
  %541 = vst.msk [vmem:[%s5 + $0x20] sm:$0xff] %vm536, %v524
  %542 = vst.msk [vmem:[%s5 + $0x28] sm:$0xff] %vm536, %v525
  %543 = vst.msk [vmem:[%s5 + $0x30] sm:$0xff] %vm536, %v526
  %544 = vst.msk [vmem:[%s5 + $0x38] sm:$0xff] %vm536, %v527
  %545 = vst.msk [vmem:[%s5 + $0x40] sm:$0xff] %vm536, %v528
  %546 = vst.msk [vmem:[%s5 + $0x48] sm:$0xff] %vm536, %v529
  %547 = vst.msk [vmem:[%s5 + $0x50] sm:$0xff] %vm536, %v530
  %548 = vst.msk [vmem:[%s5 + $0x58] sm:$0xff] %vm536, %v531
  %549 = vst.msk [vmem:[%s5 + $0x60] sm:$0xff] %vm536, %v532
  %550 = vst.msk [vmem:[%s5 + $0x68] sm:$0xff] %vm536, %v533
  %551 = vst.msk [vmem:[%s5 + $0x70] sm:$0xff] %vm536, %v534
  %552 = vst.msk [vmem:[%s5 + $0x78] sm:$0xff] %vm536, %v535
  // Predicated region
  $region22: #{tpu_custom_call.1} parent=0 // pred_check
    _
  $region23: #{tpu_custom_call.1} parent=0 // pred_check_branch
    %554 = sbr.rel (0) target = $region25
  $region24: #{tpu_custom_call.1} parent=0 // pred_region
    _
  $region25: #{tpu_custom_call.1} parent=0 // pred_fallthru
    _
  // Predicated region
  $region26: #{tpu_custom_call.1} parent=0 // pred_check
    _
  $region27: #{tpu_custom_call.1} parent=0 // pred_check_branch
    %556 = sbr.rel (0) target = $region29
  $region28: #{tpu_custom_call.1} parent=0 // pred_region
    _
  $region29: #{tpu_custom_call.1} parent=0 // pred_fallthru
    _

</llo_original>
